<compile_context>
chip_gen: v7x
topology: tpu7x:2x2x1
jax: 0.10.0
libtpu: 0.0.40
codegen_flags: <defaults>
</compile_context>

<pallas_src>
import functools
import math

import jax
import jax.numpy as jnp
from jax.experimental import pallas as pl
from jax.experimental.pallas import tpu as pltpu

LANE = 128


def _round_up(x, m):
    return ((x + m - 1) // m) * m


def _cdiv(a, b):
    return (a + b - 1) // b


def _vmem_capacity_bytes():
    """Physical VMEM per TensorCore (128 MiB on v5e/v6e, 64 MiB on v7x)."""
    try:
        cap = getattr(pltpu.get_tpu_info(), "vmem_capacity_bytes", None)
        if cap:
            return int(cap)
    except Exception:
        pass
    return 64 << 20  # conservative fallback (v7x per-TC)


def _ln_act_epilogue(y, bgb_ref, o_ref, *, out_dims, eps, act_fn):
    """y: (tm, out_pad) f32 matmul result (bias not yet added). Writes o_ref."""
    bias = bgb_ref[0:1, :].astype(jnp.float32)
    gamma = bgb_ref[1:2, :].astype(jnp.float32)
    beta = bgb_ref[2:3, :].astype(jnp.float32)

    y = y + bias  # padded lanes stay exactly 0 (x, W^T and bias are zero-padded)

    # Dropout (p=0.1) is identity in eval/inference mode.
    # TODO(synk): training-mode dropout (Bernoulli mask + 1/(1-p) scale) not emitted.

    out_pad = y.shape[-1]
    n_pad = out_pad - out_dims
    inv_n = 1.0 / out_dims

    # Unmasked sum == valid-lane sum because padded lanes of y are exactly zero.
    mean = jnp.sum(y, axis=-1, keepdims=True) * inv_n
    centered = y - mean
    sq = jnp.sum(centered * centered, axis=-1, keepdims=True)
    if n_pad:
        # Each padded lane contributed (0 - mean)^2 = mean^2: remove with a scalar
        # correction instead of a per-lane iota/where mask.
        sq = sq - n_pad * (mean * mean)
    var = sq * inv_n
    y_norm = centered * jax.lax.rsqrt(var + eps) * gamma + beta
    if act_fn:
        y_norm = jnp.maximum(y_norm, 0.0)
    o_ref[...] = y_norm.astype(o_ref.dtype)


def _resident_kernel(x_ref, w_ref, bgb_ref, o_ref, *, out_dims, eps, act_fn):
    """Single K step: whole W^T resident in VMEM, no accumulator scratch."""
    y = jnp.dot(x_ref[...], w_ref[...], preferred_element_type=jnp.float32)
    _ln_act_epilogue(y, bgb_ref, o_ref, out_dims=out_dims, eps=eps, act_fn=act_fn)


def _ktiled_kernel(x_ref, w_ref, bgb_ref, o_ref, acc_ref, *, out_dims, eps, act_fn):
    """K-tiled reduction (requires >= 2 K steps; the wrapper guarantees it)."""
    k = pl.program_id(1)
    nk = pl.num_programs(1)
    partial = jnp.dot(x_ref[...], w_ref[...], preferred_element_type=jnp.float32)

    @pl.when(k == 0)
    def _():
        acc_ref[...] = partial  # replaces separate zero-init + accumulate

    @pl.when(jnp.logical_and(k > 0, k < nk - 1))
    def _():
        acc_ref[...] += partial

    @pl.when(k == nk - 1)
    def _():
        # Fold the last partial product straight into the epilogue: no full-tile
        # accumulator store + immediate reload on the final K step.
        _ln_act_epilogue(acc_ref[...] + partial, bgb_ref, o_ref,
                         out_dims=out_dims, eps=eps, act_fn=act_fn)


def prepare_params(weight, bias, gamma, beta, *, compute_dtype=None,
                   block_k=512, min_k_tiles=1):
    """One-time layout prep (keep out of the per-call path).

    W -> W^T, zero-padded to (K_PAD, OUT_PAD) in the MXU compute dtype;
    bias/gamma/beta packed into a resident f32 (3, OUT_PAD) slab.
    """
    out_dims, in_dims = weight.shape
    cdtype = jnp.dtype(compute_dtype) if compute_dtype is not None else jnp.dtype(weight.dtype)
    in_is = cdtype.itemsize

    out_pad = _round_up(out_dims, LANE)
    k_lane = _round_up(in_dims, LANE)

    vmem_cap = _vmem_capacity_bytes()
    budget = vmem_cap - (8 << 20)          # headroom for compiler scratch / semaphores

    # Weight-resident path whenever the double-buffered W^T uses <= 40% of budget.
    resident = (min_k_tiles <= 1
                and 2 * k_lane * out_pad * in_is <= (4 * budget) // 10)
    if resident:
        n_k, tk = 1, k_lane
    else:
        n_k = max(2, min_k_tiles, _cdiv(k_lane, block_k))
        tk = _round_up(_cdiv(k_lane, n_k), LANE)
        # Never let one (double-buffered) weight K-slab eat > 40% of the budget.
        while 2 * tk * out_pad * in_is > (4 * budget) // 10 and tk > LANE:
            n_k += 1
            tk = _round_up(_cdiv(k_lane, n_k), LANE)
        n_k = _cdiv(k_lane, tk)
    k_pad = n_k * tk

    w_t = jnp.zeros((k_pad, out_pad), cdtype)
    w_t = w_t.at[:in_dims, :out_dims].set(weight.T.astype(cdtype))

    bgb = jnp.zeros((3, out_pad), jnp.float32)   # tiny -> keep full precision
    bgb = bgb.at[0, :out_dims].set(bias.astype(jnp.float32))
    bgb = bgb.at[1, :out_dims].set(gamma.astype(jnp.float32))
    bgb = bgb.at[2, :out_dims].set(beta.astype(jnp.float32))

    return dict(w_t=w_t, bgb=bgb, in_dims=in_dims, out_dims=out_dims,
                out_pad=out_pad, k_pad=k_pad, tk=tk, n_k=n_k,
                compute_dtype=cdtype, vmem_cap=vmem_cap, budget=budget)


def linear_layer_forward(x, params, *, block_rows=512, eps=1e-5, act_fn=True):
    """x: [batch, seq, in_dims] -> [batch, seq, out_dims]."""
    batch, seq, in_dims = x.shape
    assert in_dims == params["in_dims"]
    out_dims = params["out_dims"]
    out_pad, k_pad, tk, n_k = (params["out_pad"], params["k_pad"],
                               params["tk"], params["n_k"])
    cdtype = params["compute_dtype"]
    vmem_cap, budget = params["vmem_cap"], params["budget"]

    out_dtype = x.dtype
    in_is = jnp.dtype(cdtype).itemsize
    out_is = jnp.dtype(out_dtype).itemsize
    sublane_min = max(8, 32 // in_is, 32 // out_is)

    M = batch * seq
    use_ktiled = n_k > 1

    def align_rows(r):
        return _round_up(r, 256) if r >= 256 else _round_up(max(r, 1), sublane_min)

    # Balanced M tiling: enough tiles to respect block_rows, and >= 2 tiles for
    # large M so the "parallel" axis can shard across both v7x TensorCores.
    n_m = max(_cdiv(M, block_rows), 2 if M >= 512 else 1)
    tm = align_rows(_cdiv(M, n_m))

    def footprint(rows):
        b = 2 * (rows * tk * in_is            # x tile (double-buffered)
                 + tk * out_pad * in_is       # W^T slab
                 + rows * out_pad * out_is    # output tile
                 + 3 * out_pad * 4)           # bias/gamma/beta
        if use_ktiled:
            b += rows * out_pad * 4           # f32 accumulator scratch
        return b

    # Shrink the row tile until it fits the generation's VMEM budget
    # (the f32 accumulator / output tile is the biggest per-row buffer).
    while footprint(tm) > budget and tm > sublane_min:
        tm = max(sublane_min, align_rows(tm // 2))

    n_m = _cdiv(M, tm)
    m_pad = n_m * tm

    x2d = x.reshape(M, in_dims).astype(cdtype)
    pad_m, pad_k = m_pad - M, k_pad - in_dims
    if pad_m or pad_k:
        # Pad only the dims that actually need it (lane-dense K, whole M tiles).
        x2d = jnp.pad(x2d, ((0, pad_m), (0, pad_k)))

    vmem_limit = int(min(vmem_cap - (2 << 20),
                         max(footprint(tm) + (4 << 20), 32 << 20)))

    if use_ktiled:
        kernel = functools.partial(_ktiled_kernel, out_dims=out_dims,
                                   eps=eps, act_fn=act_fn)
        grid = (n_m, n_k)
        in_specs = [
            pl.BlockSpec((tm, tk), lambda i, k: (i, k)),        # x K-slab
            pl.BlockSpec((tk, out_pad), lambda i, k: (k, 0)),   # W^T K-slab
            pl.BlockSpec((3, out_pad), lambda i, k: (0, 0)),    # bias/gamma/beta
        ]
        out_specs = pl.BlockSpec((tm, out_pad), lambda i, k: (i, 0))
        scratch_shapes = [pltpu.VMEM((tm, out_pad), jnp.float32)]
        dim_sem = ("parallel", "arbitrary")
    else:
        kernel = functools.partial(_resident_kernel, out_dims=out_dims,
                                   eps=eps, act_fn=act_fn)
        grid = (n_m,)
        in_specs = [
            pl.BlockSpec((tm, k_pad), lambda i: (i, 0)),        # x full-K row slab
            pl.BlockSpec((k_pad, out_pad), lambda i: (0, 0)),   # W^T, DMA'd once
            pl.BlockSpec((3, out_pad), lambda i: (0, 0)),       # bias/gamma/beta
        ]
        out_specs = pl.BlockSpec((tm, out_pad), lambda i: (i, 0))
        scratch_shapes = []
        dim_sem = ("parallel",)

    out = pl.pallas_call(
        kernel,
        out_shape=jax.ShapeDtypeStruct((m_pad, out_pad), out_dtype),
        grid_spec=pltpu.PrefetchScalarGridSpec(
            num_scalar_prefetch=0,
            grid=grid,
            in_specs=in_specs,
            out_specs=out_specs,
            scratch_shapes=scratch_shapes,
        ),
        compiler_params=pltpu.CompilerParams(
            dimension_semantics=dim_sem,
            vmem_limit_bytes=vmem_limit,
        ),
    )(x2d, params["w_t"], params["bgb"])

    return out[:M, :out_dims].reshape(batch, seq, out_dims)


def init_params(key, in_dims, out_dims):
    """Deterministic init matching nn.Linear / nn.LayerNorm shapes."""
    k_w, k_b = jax.random.split(key)
    bound_w = 1.0 / math.sqrt(in_dims)
    weight = jax.random.uniform(k_w, (out_dims, in_dims), jnp.float32,
                                minval=-bound_w, maxval=bound_w)
    bias = jax.random.uniform(k_b, (out_dims,), jnp.float32,
                              minval=-bound_w, maxval=bound_w)
    gamma = jnp.ones((out_dims,), jnp.float32)
    beta = jnp.zeros((out_dims,), jnp.float32)
    return weight, bias, gamma, beta


if __name__ == "__main__":
    key = jax.random.PRNGKey(0)
    k_x, k_p, k_x2, k_p2 = jax.random.split(key, 4)

    def reference(x, weight, bias, gamma, beta, eps=1e-5):
        y = x @ weight.T + bias
        mean = y.mean(-1, keepdims=True)
        var = ((y - mean) ** 2).mean(-1, keepdims=True)
        y = (y - mean) / jnp.sqrt(var + eps) * gamma + beta
        return jnp.maximum(y, 0.0)

    # 1) Small f32 case -> weight-resident single-K-step path.
    batch, seq, in_dims, out_dims = 2, 8, 32, 32
    x = jax.random.normal(k_x, (batch, seq, in_dims), jnp.float32)
    weight, bias, gamma, beta = init_params(k_p, in_dims, out_dims)
    params = prepare_params(weight, bias, gamma, beta)
    out = jax.block_until_ready(linear_layer_forward(x, params))
    ref = reference(x, weight, bias, gamma, beta)
    assert out.shape == (batch, seq, out_dims)
    assert jnp.allclose(out, ref, atol=1e-4, rtol=1e-4), "f32 resident path mismatch"

    # 2) Non-multiple-of-128 dims, forced K-tiled reduction path.
    in2, out2 = 160, 96
    x2 = jax.random.normal(k_x2, (batch, seq, in2), jnp.float32)
    w2, b2, g2, bt2 = init_params(k_p2, in2, out2)
    params2 = prepare_params(w2, b2, g2, bt2, min_k_tiles=2)
    out2a = jax.block_until_ready(linear_layer_forward(x2, params2))
    ref2 = reference(x2, w2, b2, g2, bt2)
    assert out2a.shape == (batch, seq, out2)
    assert jnp.allclose(out2a, ref2, atol=1e-4, rtol=1e-4), "k-tiled path mismatch"

    # 3) bf16 MXU operands (f32 accumulation) -> looser tolerance vs f32 reference.
    params3 = prepare_params(weight, bias, gamma, beta, compute_dtype=jnp.bfloat16)
    out3 = jax.block_until_ready(linear_layer_forward(x, params3))
    assert out3.shape == (batch, seq, out_dims)
    assert jnp.allclose(out3, ref, atol=1e-1), "bf16 path mismatch"

    print("KERNEL_OK")
</pallas_src>

<mosaic_0001>
module attributes {stable_mosaic.version = 11 : i64} {
  func.func @_resident_kernel(%arg0: i32, %arg1: memref<16x128xf32, #tpu.memory_space<vmem>>, %arg2: memref<128x128xf32, #tpu.memory_space<vmem>>, %arg3: memref<3x128xf32, #tpu.memory_space<vmem>>, %arg4: memref<16x128xf32, #tpu.memory_space<vmem>>) attributes {dimension_semantics = [#tpu.dimension_semantics<parallel>], iteration_bounds = array<i64: 1>, scalar_prefetch = 0 : i64, scratch_operands = 0 : i64, tpu.core_type = #tpu.core_type<tc>, window_params = [{transform_indices = @transform_0, window_bounds = array<i64: 16, 128>}, {pipeline_mode = #tpu.pipeline_mode<synchronous>, transform_indices = @transform_1, window_bounds = array<i64: 128, 128>}, {pipeline_mode = #tpu.pipeline_mode<synchronous>, transform_indices = @transform_2, window_bounds = array<i64: 3, 128>}, {transform_indices = @transform_3, window_bounds = array<i64: 16, 128>}]} {
    %c0 = arith.constant 0 : index
    %c0_0 = arith.constant 0 : index
    %0 = vector.load %arg1[%c0, %c0_0] : memref<16x128xf32, #tpu.memory_space<vmem>>, vector<16x128xf32>
    %c0_1 = arith.constant 0 : index
    %c0_2 = arith.constant 0 : index
    %1 = vector.load %arg2[%c0_1, %c0_2] : memref<128x128xf32, #tpu.memory_space<vmem>>, vector<128x128xf32>
    %cst = arith.constant dense<0.000000e+00> : vector<16x128xf32>
    %2 = tpu.matmul %0, %1, %cst {dimension_numbers = #tpu.dot_dimension_numbers<[1], [0], [0], [1], [0, 0, 1, 1], [], []>} : vector<16x128xf32>, vector<128x128xf32>, vector<16x128xf32> -> vector<16x128xf32>
    %c0_3 = arith.constant 0 : index
    %c0_4 = arith.constant 0 : index
    %3 = vector.load %arg3[%c0_3, %c0_4] : memref<3x128xf32, #tpu.memory_space<vmem>>, vector<1x128xf32>
    %c1 = arith.constant 1 : index
    %c0_5 = arith.constant 0 : index
    %4 = vector.load %arg3[%c1, %c0_5] : memref<3x128xf32, #tpu.memory_space<vmem>>, vector<1x128xf32>
    %c2 = arith.constant 2 : index
    %c0_6 = arith.constant 0 : index
    %5 = vector.load %arg3[%c2, %c0_6] : memref<3x128xf32, #tpu.memory_space<vmem>>, vector<1x128xf32>
    %6 = vector.broadcast %3 : vector<1x128xf32> to vector<16x128xf32>
    %7 = arith.addf %2, %6 : vector<16x128xf32>
    %cst_7 = arith.constant dense<0.000000e+00> : vector<16xf32>
    %8 = vector.multi_reduction <add>, %7, %cst_7 [1] : vector<16x128xf32> to vector<16xf32>
    %9 = vector.shape_cast %8 : vector<16xf32> to vector<16x1xf32>
    %cst_8 = arith.constant 3.125000e-02 : f32
    %10 = vector.broadcast %cst_8 : f32 to vector<16x1xf32>
    %11 = arith.mulf %9, %10 : vector<16x1xf32>
    %12 = vector.broadcast %11 : vector<16x1xf32> to vector<16x128xf32>
    %13 = arith.subf %7, %12 : vector<16x128xf32>
    %14 = arith.mulf %13, %13 : vector<16x128xf32>
    %cst_9 = arith.constant dense<0.000000e+00> : vector<16xf32>
    %15 = vector.multi_reduction <add>, %14, %cst_9 [1] : vector<16x128xf32> to vector<16xf32>
    %16 = vector.shape_cast %15 : vector<16xf32> to vector<16x1xf32>
    %17 = arith.mulf %11, %11 : vector<16x1xf32>
    %cst_10 = arith.constant 9.600000e+01 : f32
    %18 = vector.broadcast %cst_10 : f32 to vector<16x1xf32>
    %19 = arith.mulf %18, %17 : vector<16x1xf32>
    %20 = arith.subf %16, %19 : vector<16x1xf32>
    %cst_11 = arith.constant 3.125000e-02 : f32
    %21 = vector.broadcast %cst_11 : f32 to vector<16x1xf32>
    %22 = arith.mulf %20, %21 : vector<16x1xf32>
    %cst_12 = arith.constant 9.99999974E-6 : f32
    %23 = vector.broadcast %cst_12 : f32 to vector<16x1xf32>
    %24 = arith.addf %22, %23 : vector<16x1xf32>
    %25 = math.rsqrt %24 : vector<16x1xf32>
    %26 = vector.broadcast %25 : vector<16x1xf32> to vector<16x128xf32>
    %27 = arith.mulf %13, %26 : vector<16x128xf32>
    %28 = vector.broadcast %4 : vector<1x128xf32> to vector<16x128xf32>
    %29 = arith.mulf %27, %28 : vector<16x128xf32>
    %30 = vector.broadcast %5 : vector<1x128xf32> to vector<16x128xf32>
    %31 = arith.addf %29, %30 : vector<16x128xf32>
    %cst_13 = arith.constant 0.000000e+00 : f32
    %32 = vector.broadcast %cst_13 : f32 to vector<16x128xf32>
    %33 = arith.maximumf %31, %32 : vector<16x128xf32>
    %c0_14 = arith.constant 0 : index
    %c0_15 = arith.constant 0 : index
    %34 = vector.load %arg4[%c0_14, %c0_15] : memref<16x128xf32, #tpu.memory_space<vmem>>, vector<16x128xf32>
    tpu.vector_store %arg4[%c0_14, %c0_15], %33 {strides = array<i32>} : memref<16x128xf32, #tpu.memory_space<vmem>>, vector<16x128xf32>,
    return
  }
  func.func @transform_0(%arg0: i32) -> (i32, i32) {
    %c0_i32 = arith.constant 0 : i32
    %c0_i32_0 = arith.constant 0 : i32
    return %arg0, %c0_i32 : i32, i32
  }
  func.func @transform_1(%arg0: i32) -> (i32, i32) {
    %c0_i32 = arith.constant 0 : i32
    %c0_i32_0 = arith.constant 0 : i32
    %c0_i32_1 = arith.constant 0 : i32
    return %c0_i32, %c0_i32_0 : i32, i32
  }
  func.func @transform_2(%arg0: i32) -> (i32, i32) {
    %c0_i32 = arith.constant 0 : i32
    %c0_i32_0 = arith.constant 0 : i32
    %c0_i32_1 = arith.constant 0 : i32
    return %c0_i32, %c0_i32_0 : i32, i32
  }
  func.func @transform_3(%arg0: i32) -> (i32, i32) {
    %c0_i32 = arith.constant 0 : i32
    %c0_i32_0 = arith.constant 0 : i32
    return %arg0, %c0_i32 : i32, i32
  }
}

</mosaic_0001>

<llo_original>
// kernel: tpu_custom_call.1
$region0: #{tpu_custom_call.1}
  #allocation0 [shape = 'u32[]', space=smem, size = 0x4, offset = 0x4, fixed_abs, tag = 'smem constant byte address 0x4 - core index']
  #allocation1 [shape = 'u32[144,128]{1,0:T(1,128)}', space=vmem, size = 0x12000, scoped, tag = 'internal scratch']
  %s0 = inlined_call_operand.hbm [shape: f32[16,128], index: 0, kind: input, shape index: {}]
  %s1 = inlined_call_operand.hbm [shape: f32[128,128], index: 1, kind: input, shape index: {}]
  %s2 = inlined_call_operand.vmem [shape: f32[3,128], index: 2, kind: input, shape index: {}]
  %s3 = inlined_call_operand.hbm [shape: f32[16,128], index: 3, kind: output, shape index: {}]
  %s4 = sld [smem:[#allocation0]]
  $region30: #{tpu_custom_call.1} parent=0
    _
  %s6 = ssub.s32 1, %s4
  %s7 = scalar_select 0, %s6, %s4
  $region1: #{tpu_custom_call.1} parent=0
    #allocation2 [shape = 'u8[8192]{0}', space=vmem, size = 0x2000, scoped, tag = 'input window, operand 0, single buffered']
    #allocation3 [shape = 's32[1]{0}', space=sflag, size = 0x4, scoped, tag = 'scoped memory for tpu_custom_call.1']
    #allocation4 [shape = 's32[1]{0}', space=sflag, size = 0x4, scoped, tag = 'scoped memory for tpu_custom_call.1']
    #allocation5 [shape = 'u8[65536]{0}', space=vmem, size = 0x10000, scoped, tag = 'input window, operand 1, single buffered']
    #allocation6 [shape = 's32[1]{0}', space=sflag, size = 0x4, scoped, tag = 'scoped memory for tpu_custom_call.1']
    #allocation7 [shape = 'u8[8192]{0}', space=vmem, size = 0x2000, scoped, tag = 'output window, operand 0, single buffered']
    %8 = vsyncpa [#allocation3], 0
    %9 = vsyncpa [#allocation6], 0
    %10 = vsyncpa [#allocation4], 0
    // Predicated region
    $region2: #{tpu_custom_call.1} parent=1 // pred_check
      _
    $region3: #{tpu_custom_call.1} parent=1 // pred_check_branch
      %12 = sbr.rel (0) target = $region5
    $region4: #{tpu_custom_call.1} parent=1 // pred_region
      %s14 = ssub.s32 256, 256
      %15 = vsyncadd [#allocation3], %s14
      %s16 = sshll.u32 [#allocation2], 4
      %s17 = int_to_ptr.vmem [resolvable:$true] %s16
      %22 = dma.hbm_to_vmem [thread:$0]  %s0, 256, %s17, [#allocation3], 128, 128, 8
    $region5: #{tpu_custom_call.1} parent=1 // pred_fallthru
      _
    // Predicated region
    $region6: #{tpu_custom_call.1} parent=1 // pred_check
      _
    $region7: #{tpu_custom_call.1} parent=1 // pred_check_branch
      %24 = sbr.rel (0) target = $region9
    $region8: #{tpu_custom_call.1} parent=1 // pred_region
      %s26 = ssub.s32 2048, 2048
      %27 = vsyncadd [#allocation6], %s26
      %s28 = sshll.u32 [#allocation5], 4
      %s29 = int_to_ptr.vmem [resolvable:$true] %s28
      %34 = dma.hbm_to_vmem [thread:$0]  %s1, 2048, %s29, [#allocation6], 128, 128, 8
    $region9: #{tpu_custom_call.1} parent=1 // pred_fallthru
      _
    // Predicated region
    $region10: #{tpu_custom_call.1} parent=1 // pred_check
      _
    $region11: #{tpu_custom_call.1} parent=1 // pred_check_branch
      %36 = sbr.rel (0) target = $region13
    $region12: #{tpu_custom_call.1} parent=1 // pred_region
      _
    $region13: #{tpu_custom_call.1} parent=1 // pred_fallthru
      _
    // Predicated region
    $region14: #{tpu_custom_call.1} parent=1 // pred_check
      _
    $region15: #{tpu_custom_call.1} parent=1 // pred_check_branch
      %38 = sbr.rel (0) target = $region17
    $region16: #{tpu_custom_call.1} parent=1 // pred_region
      %39 = dma.done [#allocation3], 256
    $region17: #{tpu_custom_call.1} parent=1 // pred_fallthru
      _
    // Predicated region
    $region18: #{tpu_custom_call.1} parent=1 // pred_check
      _
    $region19: #{tpu_custom_call.1} parent=1 // pred_check_branch
      %41 = sbr.rel (0) target = $region21
    $region20: #{tpu_custom_call.1} parent=1 // pred_region
      %42 = dma.done [#allocation6], 2048
    $region21: #{tpu_custom_call.1} parent=1 // pred_fallthru
      _
    %v43 = vld [vmem:[#allocation2] sm:$0xff]
    %v44 = vld [vmem:[#allocation2 + $0x8] sm:$0xff]
    %v45 = vld [vmem:[#allocation5] sm:$0xff]
    %v46 = vld [vmem:[#allocation5 + $0x8] sm:$0xff]
    %v47 = vld [vmem:[#allocation5 + $0x10] sm:$0xff]
    %v48 = vld [vmem:[#allocation5 + $0x18] sm:$0xff]
    %v49 = vld [vmem:[#allocation5 + $0x20] sm:$0xff]
    %v50 = vld [vmem:[#allocation5 + $0x28] sm:$0xff]
    %v51 = vld [vmem:[#allocation5 + $0x30] sm:$0xff]
    %v52 = vld [vmem:[#allocation5 + $0x38] sm:$0xff]
    %v53 = vld [vmem:[#allocation5 + $0x40] sm:$0xff]
    %v54 = vld [vmem:[#allocation5 + $0x48] sm:$0xff]
    %v55 = vld [vmem:[#allocation5 + $0x50] sm:$0xff]
    %v56 = vld [vmem:[#allocation5 + $0x58] sm:$0xff]
    %v57 = vld [vmem:[#allocation5 + $0x60] sm:$0xff]
    %v58 = vld [vmem:[#allocation5 + $0x68] sm:$0xff]
    %v59 = vld [vmem:[#allocation5 + $0x70] sm:$0xff]
    %v60 = vld [vmem:[#allocation5 + $0x78] sm:$0xff]
    %v61 = vld [vmem:[%s2] sm:$0x1]
    %v62 = vld [vmem:[%s2 + $0x1] sm:$0x1]
    %v63 = vld [vmem:[%s2 + $0x2] sm:$0x1]
    %v64 = vlaneseq
    %v65 = vshrl.u32 %v64, 7
    %v66 = vsub.s32 0, %v65
    %v67 = vrot.slane %v61, %v66
    %68 = vmatprep.subr.mxu0 0.0
    %69 = vmatpush1.msra.mxu0 %v45
    %70 = vmatprep.subr.mxu0 0.0
    %71 = vmatpush1.msra.mxu0 %v46
    %72 = vmatprep.subr.mxu0 0.0
    %73 = vmatpush1.msra.mxu0 %v47
    %74 = vmatprep.subr.mxu0 0.0
    %75 = vmatpush1.msra.mxu0 %v48
    %76 = vmatprep.subr.mxu0 0.0
    %77 = vmatpush1.msra.mxu0 %v49
    %78 = vmatprep.subr.mxu0 0.0
    %79 = vmatpush1.msra.mxu0 %v50
    %80 = vmatprep.subr.mxu0 0.0
    %81 = vmatpush1.msra.mxu0 %v51
    %82 = vmatprep.subr.mxu0 0.0
    %83 = vmatpush1.msra.mxu0 %v52
    %84 = vmatprep.subr.mxu0 0.0
    %85 = vmatpush1.msra.mxu0 %v53
    %86 = vmatprep.subr.mxu0 0.0
    %87 = vmatpush1.msra.mxu0 %v54
    %88 = vmatprep.subr.mxu0 0.0
    %89 = vmatpush1.msra.mxu0 %v55
    %90 = vmatprep.subr.mxu0 0.0
    %91 = vmatpush1.msra.mxu0 %v56
    %92 = vmatprep.subr.mxu0 0.0
    %93 = vmatpush1.msra.mxu0 %v57
    %94 = vmatprep.subr.mxu0 0.0
    %95 = vmatpush1.msra.mxu0 %v58
    %96 = vmatprep.subr.mxu0 0.0
    %97 = vmatpush1.msra.mxu0 %v59
    %98 = vmatprep.subr.mxu0 0.0
    %99 = vmatpush1.msra.mxu0 %v60
    %100 = vmatprep.subr.mxu0 0.0
    %101 = vmatpush1.msra.mxu0 0.0
    %102 = vmatprep.subr.mxu0 0.0
    %103 = vmatpush1.msra.mxu0 0.0
    %104 = vmatprep.subr.mxu0 0.0
    %105 = vmatpush1.msra.mxu0 0.0
    %106 = vmatprep.subr.mxu0 0.0
    %107 = vmatpush1.msra.mxu0 0.0
    %108 = vmatprep.subr.mxu0 0.0
    %109 = vmatpush1.msra.mxu0 0.0
    %110 = vmatprep.subr.mxu0 0.0
    %111 = vmatpush1.msra.mxu0 0.0
    %112 = vmatprep.subr.mxu0 0.0
    %113 = vmatpush1.msra.mxu0 0.0
    %114 = vmatprep.subr.mxu0 0.0
    %115 = vmatpush1.msra.mxu0 0.0
    %116 = vmatprep.subr.mxu0 0.0
    %117 = vmatpush1.msra.mxu0 0.0
    %118 = vmatprep.subr.mxu0 0.0
    %119 = vmatpush1.msra.mxu0 0.0
    %120 = vmatprep.subr.mxu0 0.0
    %121 = vmatpush1.msra.mxu0 0.0
    %122 = vmatprep.subr.mxu0 0.0
    %123 = vmatpush1.msra.mxu0 0.0
    %124 = vmatprep.subr.mxu0 0.0
    %125 = vmatpush1.msra.mxu0 0.0
    %126 = vmatprep.subr.mxu0 0.0
    %127 = vmatpush1.msra.mxu0 0.0
    %128 = vmatprep.subr.mxu0 0.0
    %129 = vmatpush1.msra.mxu0 0.0
    %130 = vmatprep.subr.mxu0 0.0
    %131 = vmatpush1.msra.mxu0 0.0
    %132 = vmatprep.mubr.f32.mxu0 0.0
    %133 = vmatmul.mubr.f32.gmra.mrb[0].mxu0 %v43
    %v134 = vpop.f32.mrb[0].mxu0
    %v135 = vadd.f32 %v67, %v134
    %v136 = vpop.f32.mrb[0].mxu0
    %137 = vmatprep.mubr.f32.mxu0 0.0
    %138 = vmatmul.mubr.f32.gmra.mrb[0].mxu0 %v44
    %v139 = vpop.f32.mrb[0].mxu0
    %v140 = vadd.f32 %v67, %v139
    %v141 = vpop.f32.mrb[0].mxu0
    %142 = vdwg.mxu0
    %143 = vadd.xlane.f32.xlu0 %v135
    %v144 = vpop.xlane.xlu0 %143
    %145 = vadd.xlane.f32.xlu0 %v140
    %v146 = vpop.xlane.xlu0 %145
    %v147 = vmul.f32 %v144, 0.03125
    %v148 = vmul.f32 %v146, 0.03125
    %v149 = vsub.f32 %v135, %v147
    %v150 = vsub.f32 %v140, %v148
    %v151 = vmul.f32 %v149, %v149
    %v152 = vmul.f32 %v150, %v150
    %153 = vadd.xlane.f32.xlu0 %v151
    %v154 = vpop.xlane.xlu0 %153
    %155 = vadd.xlane.f32.xlu0 %v152
    %v156 = vpop.xlane.xlu0 %155
    %v157 = vmul.f32 %v147, %v147
    %v158 = vmul.f32 %v148, %v148
    %v159 = vmul.f32 %v157, 96.0
    %v160 = vmul.f32 %v158, 96.0
    %v161 = vsub.f32 %v154, %v159
    %v162 = vsub.f32 %v156, %v160
    %v163 = vmul.f32 %v161, 0.03125
    %v164 = vmul.f32 %v162, 0.03125
    %v165 = vadd.f32 %v163, 1e-05
    %v166 = vadd.f32 %v164, 1e-05
    %v167 = vrsqrt.pop %v165
    %v168 = vrsqrt.pop %v166
    %v169 = vmul.f32 %v149, %v167
    %v170 = vmul.f32 %v150, %v168
    %v171 = vlaneseq
    %v172 = vshrl.u32 %v171, 7
    %v173 = vsub.s32 0, %v172
    %v174 = vrot.slane %v62, %v173
    %v175 = vmul.f32 %v169, %v174
    %v176 = vmul.f32 %v170, %v174
    %v177 = vlaneseq
    %v178 = vshrl.u32 %v177, 7
    %v179 = vsub.s32 0, %v178
    %v180 = vrot.slane %v63, %v179
    %v181 = vadd.f32 %v175, %v180
    %v182 = vadd.f32 %v176, %v180
    %v183 = vmax.f32 %v181, 0.0
    %v184 = vmax.f32 %v182, 0.0
    %185 = vst [vmem:[#allocation7] sm:$0xff] %v183
    %186 = vst [vmem:[#allocation7 + $0x8] sm:$0xff] %v184
    // Predicated region
    $region22: #{tpu_custom_call.1} parent=1 // pred_check
      _
    $region23: #{tpu_custom_call.1} parent=1 // pred_check_branch
      %188 = sbr.rel (0) target = $region25
    $region24: #{tpu_custom_call.1} parent=1 // pred_region
      %s190 = ssub.s32 256, 256
      %191 = vsyncadd [#allocation4], %s190
      %s192 = sshll.u32 [#allocation7], 4
      %s193 = int_to_ptr.vmem [resolvable:$true] %s192
      %198 = dma.vmem_to_hbm [thread:$0]  %s193, 256, %s3, [#allocation4], 128, 128, 8
    $region25: #{tpu_custom_call.1} parent=1 // pred_fallthru
      _
    // Predicated region
    $region26: #{tpu_custom_call.1} parent=1 // pred_check
      _
    $region27: #{tpu_custom_call.1} parent=1 // pred_check_branch
      %200 = sbr.rel (0) target = $region29
    $region28: #{tpu_custom_call.1} parent=1 // pred_region
      %201 = dma.done [#allocation4], 256
    $region29: #{tpu_custom_call.1} parent=1 // pred_fallthru
      _
    %202 = vsyncpa [#allocation3], 1
    %203 = vsyncpa [#allocation6], 1
    %204 = vsyncpa [#allocation4], 1

</llo_original>
